<compile_context>
chip_gen: v7x
topology: tpu7x:2x2x1
jax: 0.10.0
libtpu: 0.0.40
codegen_flags: <defaults>
</compile_context>

<pallas_src>
import jax
import jax.numpy as jnp
from jax import lax
from jax.experimental import pallas as pl
from jax.experimental.pallas import tpu as pltpu


# ----------------------------------------------------------------------------
# Shared epilogue: position add + token-type select-accumulate (T is tiny).
# Token-type ids outside [0, T) contribute 0 (minor divergence from
# nn.Embedding, which would error; matches the sparse-addmm spirit).
# ----------------------------------------------------------------------------
def _add_pos_and_tokentype(acc, pos_vals, types_col, tt_vals):
    acc = acc + pos_vals
    T, H = tt_vals.shape
    for t in range(T):                      # static, small (e.g. 2..4)
        row = tt_vals[t, :][None, :]        # (1, H)
        acc = acc + jnp.where(types_col == t, row, jnp.zeros_like(row))
    return acc


# ----------------------------------------------------------------------------
# Fast path: vocab table fully VMEM-resident; gather == one-hot MXU matmul.
# ----------------------------------------------------------------------------
def embed_kernel_resident(idx_col_ref,   # VMEM (ts, 1) int32
                          types_ref,     # VMEM (ts, 1) int32
                          vocab_ref,     # VMEM (V, H)
                          pos_ref,       # VMEM (ts, H)
                          tt_ref,        # VMEM (T, H)
                          o_ref):        # VMEM (ts, H)
    V, H = vocab_ref.shape
    ts = o_ref.shape[0]

    idx_col = idx_col_ref[...]                                  # (ts, 1)
    valid = (idx_col >= 0) & (idx_col < V)                      # (ts, 1) bool

    cols = lax.broadcasted_iota(jnp.int32, (ts, V), 1)          # (ts, V)
    onehot = jnp.where((cols == idx_col) & valid, 1.0, 0.0)
    onehot = onehot.astype(vocab_ref.dtype)

    # Exact gather via MXU (one-hot rows of 1.0 -> exact products / sums).
    acc = jnp.dot(onehot, vocab_ref[...], preferred_element_type=jnp.float32)
    acc = acc.astype(pos_ref.dtype)

    acc = _add_pos_and_tokentype(acc, pos_ref[...], types_ref[...], tt_ref[...])
    o_ref[...] = acc.astype(o_ref.dtype)


# ----------------------------------------------------------------------------
# Large-vocab path: HBM-resident table, manual row-gather DMAs,
# single bulk wait per tile, double-buffered across the inner batch axis.
# ----------------------------------------------------------------------------
def embed_kernel_gather(idx_flat_ref,   # SMEM (batch*seq,) int32 (scalar prefetch)
                        idx_col_ref,    # VMEM (ts, 1) int32
                        types_ref,      # VMEM (ts, 1) int32
                        vocab_hbm,      # HBM  (V, H)   (memory_space=pl.ANY)
                        pos_ref,        # VMEM (ts, H)
                        tt_ref,         # VMEM (T, H)
                        o_ref,          # VMEM (ts, H)
                        gather_buf,     # VMEM (2*ts, H) scratch (2 slots)
                        sems):          # DMA semaphores (2,)
    s = pl.program_id(0)                # seq-tile index (outer, "parallel")
    b = pl.program_id(1)                # batch index    (inner, "arbitrary")
    nb = pl.num_programs(1)
    ts, H = o_ref.shape
    V = vocab_hbm.shape[0]
    seq = pl.num_programs(0) * ts

    unroll = True if ts <= 32 else 8

    def issue_rows(b_t, slot):
        # Issue ts row DMAs (HBM -> VMEM slot) onto ONE semaphore.
        base = b_t * seq + s * ts

        def body(j, carry):
            tok = idx_flat_ref[base + j]
            safe = jnp.where((tok >= 0) & (tok < V), tok, 0)   # clamp OOR for DMA
            pltpu.make_async_copy(
                vocab_hbm.at[pl.ds(safe, 1), :],
                gather_buf.at[pl.ds(slot * ts + j, 1), :],
                sems.at[slot],
            ).start()
            return carry

        lax.fori_loop(0, ts, body, 0, unroll=unroll)

    slot = b % 2

    # Prime the pipeline at the start of each seq tile (per-core safe even if
    # the "parallel" seq axis is megacore-sharded: all carried state lives
    # inside one seq tile's batch loop).
    @pl.when(b == 0)
    def _():
        issue_rows(0, 0)

    # Prefetch the NEXT batch tile of this seq tile into the other slot
    # before waiting on the current one (hides the gather latency).
    @pl.when(b + 1 < nb)
    def _():
        issue_rows(b + 1, (b + 1) % 2)

    # ONE bulk wait covering all ts row copies of the current slot
    # (descriptor size == sum of the issued row-copy sizes).
    off = pl.multiple_of(slot * ts, ts)
    cur = gather_buf.at[pl.ds(off, ts), :]
    pltpu.make_async_copy(cur, cur, sems.at[slot]).wait()

    rows = gather_buf[pl.ds(off, ts), :]                       # (ts, H)

    # Vectorized out-of-range vocab mask (whole-tile VPU select).
    idx_col = idx_col_ref[...]                                 # (ts, 1)
    valid = (idx_col >= 0) & (idx_col < V)
    acc = jnp.where(valid, rows, jnp.zeros_like(rows))

    acc = _add_pos_and_tokentype(acc, pos_ref[...], types_ref[...], tt_ref[...])
    o_ref[...] = acc.astype(o_ref.dtype)


# ----------------------------------------------------------------------------
# Wrapper
# ----------------------------------------------------------------------------
def ppt_embedding(idx, types, vocab_weight, pos_weight, tokentype_weight, *,
                  ts=None, vmem_resident=None):
    """Forward of PPTEmbedding for the single-shard (summa_dim == 1) case."""
    batch, seq = idx.shape
    V, H = vocab_weight.shape
    S, _ = pos_weight.shape
    T, _ = tokentype_weight.shape
    assert S == seq, "pos_weight rows must equal sequence length"

    if ts is None:
        if seq <= 256:
            ts = seq
        elif seq % 256 == 0:
            ts = 256
        elif seq % 128 == 0:
            ts = 128
        else:
            ts = seq
    assert seq % ts == 0

    itemsize = jnp.dtype(vocab_weight.dtype).itemsize
    table_bytes = V * H * itemsize
    if vmem_resident is None:
        # Small / sharded vocab tables: keep resident in VMEM (per-row 512 B
        # DMAs would be pure descriptor overhead).
        vmem_resident = table_bytes <= (8 << 20)

    # Explicit scoped-VMEM budget (v5e default 16 MiB is too small for big H);
    # capped at 64 MiB so it is also valid on v7x.
    tile_bytes = ts * H * itemsize
    est = 4 * tile_bytes                      # 2x pos tile + 2x out tile
    est += 4 * ts * 4                         # idx_col + types tiles (x2 bufs)
    est += 2 * T * H * itemsize               # tokentype table
    est += (2 * table_bytes) if vmem_resident else (2 * tile_bytes)
    vmem_limit = int(min(max(2 * est, 16 << 20), 64 << 20))

    idx_i32 = idx.astype(jnp.int32)
    idx_flat = idx_i32.reshape(-1)                               # 1-D SMEM prefetch
    idx_col = idx_i32.reshape(batch, seq, 1)                     # (ts,1) VMEM tiles
    types_col = types.astype(jnp.int32).reshape(batch, seq, 1)

    grid = (seq // ts, batch)                                    # batch fastest

    if vmem_resident:
        grid_spec = pltpu.PrefetchScalarGridSpec(
            num_scalar_prefetch=0,
            grid=grid,
            in_specs=[
                pl.BlockSpec((None, ts, 1), lambda s, b: (b, s, 0)),   # idx
                pl.BlockSpec((None, ts, 1), lambda s, b: (b, s, 0)),   # types
                pl.BlockSpec((V, H), lambda s, b: (0, 0)),             # vocab (resident)
                pl.BlockSpec((ts, H), lambda s, b: (s, 0)),            # pos (reused over b)
                pl.BlockSpec((T, H), lambda s, b: (0, 0)),             # tokentype
            ],
            out_specs=pl.BlockSpec((None, ts, H), lambda s, b: (b, s, 0)),
            scratch_shapes=[],
        )
        kernel = embed_kernel_resident
        args = (idx_col, types_col, vocab_weight, pos_weight, tokentype_weight)
        dims = ("parallel", "parallel")
    else:
        grid_spec = pltpu.PrefetchScalarGridSpec(
            num_scalar_prefetch=1,
            grid=grid,
            in_specs=[
                pl.BlockSpec((None, ts, 1), lambda s, b, idx_r: (b, s, 0)),  # idx
                pl.BlockSpec((None, ts, 1), lambda s, b, idx_r: (b, s, 0)),  # types
                pl.BlockSpec(memory_space=pl.ANY),                           # vocab in HBM
                pl.BlockSpec((ts, H), lambda s, b, idx_r: (s, 0)),           # pos
                pl.BlockSpec((T, H), lambda s, b, idx_r: (0, 0)),            # tokentype
            ],
            out_specs=pl.BlockSpec((None, ts, H), lambda s, b, idx_r: (b, s, 0)),
            scratch_shapes=[
                pltpu.VMEM((2 * ts, H), vocab_weight.dtype),   # double-buffered gather
                pltpu.SemaphoreType.DMA((2,)),                 # one sem per slot
            ],
        )
        kernel = embed_kernel_gather
        args = (idx_flat, idx_col, types_col,
                vocab_weight, pos_weight, tokentype_weight)
        # Inner batch axis carries the double-buffer state -> "arbitrary".
        dims = ("parallel", "arbitrary")

    out = pl.pallas_call(
        kernel,
        out_shape=jax.ShapeDtypeStruct((batch, seq, H), vocab_weight.dtype),
        grid_spec=grid_spec,
        compiler_params=pltpu.CompilerParams(
            dimension_semantics=dims,
            vmem_limit_bytes=vmem_limit,
        ),
    )(*args)

    return out


def _xavier_normal(key, shape, dtype=jnp.float32):
    fan_in, fan_out = shape
    std = (2.0 / (fan_in + fan_out)) ** 0.5
    return (std * jax.random.normal(key, shape)).astype(dtype)


if __name__ == "__main__":
    # Small single-shard configuration (summa_dim = 1):
    VOCAB, HIDDEN, SEQ, BATCH, NUM_TT = 64, 128, 8, 2, 4

    key = jax.random.PRNGKey(0)
    k_v, k_p, k_t, k_i, k_y = jax.random.split(key, 5)

    vocab_weight = _xavier_normal(k_v, (VOCAB, HIDDEN))
    pos_weight = _xavier_normal(k_p, (SEQ, HIDDEN))
    tokentype_weight = _xavier_normal(k_t, (NUM_TT, HIDDEN))

    idx = jax.random.randint(k_i, (BATCH, SEQ), 0, VOCAB, dtype=jnp.int32)
    # exercise the out-of-range vocab mask path of PPTEmbedding
    idx = idx.at[0, 3].set(VOCAB)   # >= vocab size -> vocab row contributes 0
    idx = idx.at[1, 0].set(-1)      # negative      -> vocab row contributes 0
    types = jax.random.randint(k_y, (BATCH, SEQ), 0, NUM_TT, dtype=jnp.int32)

    # Pure-JAX reference (masked vocab gather + broadcast adds)
    valid = (idx >= 0) & (idx < VOCAB)
    vocab_rows = jnp.where(valid[..., None],
                           vocab_weight[jnp.clip(idx, 0, VOCAB - 1)], 0.0)
    ref = vocab_rows + pos_weight[None, :, :] + tokentype_weight[types]

    # Path 1: VMEM-resident vocab (auto-selected for this small table).
    out_fast = jax.block_until_ready(
        ppt_embedding(idx, types, vocab_weight, pos_weight, tokentype_weight))
    assert out_fast.shape == (BATCH, SEQ, HIDDEN)
    assert jnp.allclose(out_fast, ref, atol=1e-5, rtol=1e-5), \
        float(jnp.max(jnp.abs(out_fast - ref)))

    # Path 2: HBM-resident vocab with manual double-buffered row gather.
    out_gather = jax.block_until_ready(
        ppt_embedding(idx, types, vocab_weight, pos_weight, tokentype_weight,
                      vmem_resident=False))
    assert out_gather.shape == (BATCH, SEQ, HIDDEN)
    assert jnp.allclose(out_gather, ref, atol=1e-5, rtol=1e-5), \
        float(jnp.max(jnp.abs(out_gather - ref)))

    print("KERNEL_OK")
</pallas_src>

<mosaic_0001>
module attributes {stable_mosaic.version = 11 : i64} {
  func.func @embed_kernel_resident(%arg0: i32, %arg1: i32, %arg2: memref<1x8x1xi32, #tpu.memory_space<vmem>>, %arg3: memref<1x8x1xi32, #tpu.memory_space<vmem>>, %arg4: memref<64x128xf32, #tpu.memory_space<vmem>>, %arg5: memref<8x128xf32, #tpu.memory_space<vmem>>, %arg6: memref<4x128xf32, #tpu.memory_space<vmem>>, %arg7: memref<1x8x128xf32, #tpu.memory_space<vmem>>) attributes {dimension_semantics = [#tpu.dimension_semantics<parallel>, #tpu.dimension_semantics<parallel>], iteration_bounds = array<i64: 1, 2>, scalar_prefetch = 0 : i64, scratch_operands = 0 : i64, tpu.core_type = #tpu.core_type<tc>, window_params = [{transform_indices = @transform_0, window_bounds = array<i64: 1, 8, 1>}, {transform_indices = @transform_1, window_bounds = array<i64: 1, 8, 1>}, {pipeline_mode = #tpu.pipeline_mode<synchronous>, transform_indices = @transform_2, window_bounds = array<i64: 64, 128>}, {transform_indices = @transform_3, window_bounds = array<i64: 8, 128>}, {pipeline_mode = #tpu.pipeline_mode<synchronous>, transform_indices = @transform_4, window_bounds = array<i64: 4, 128>}, {transform_indices = @transform_5, window_bounds = array<i64: 1, 8, 128>}]} {
    %c0 = arith.constant 0 : index
    %c0_0 = arith.constant 0 : index
    %c0_1 = arith.constant 0 : index
    %0 = vector.load %arg2[%c0, %c0_0, %c0_1] : memref<1x8x1xi32, #tpu.memory_space<vmem>>, vector<1x8x1xi32>
    %1 = vector.shape_cast %0 : vector<1x8x1xi32> to vector<8x1xi32>
    %c0_i32 = arith.constant 0 : i32
    %2 = vector.broadcast %c0_i32 : i32 to vector<8x1xi32>
    %3 = arith.cmpi sge, %1, %2 : vector<8x1xi32>
    %c64_i32 = arith.constant 64 : i32
    %4 = vector.broadcast %c64_i32 : i32 to vector<8x1xi32>
    %5 = arith.cmpi slt, %1, %4 : vector<8x1xi32>
    %6 = arith.andi %3, %5 : vector<8x1xi1>
    %7 = tpu.iota {dimensions = array<i32: 1>} : vector<8x64xi32>
    %8 = vector.broadcast %1 : vector<8x1xi32> to vector<8x64xi32>
    %9 = arith.cmpi eq, %7, %8 : vector<8x64xi32>
    %10 = vector.broadcast %6 : vector<8x1xi1> to vector<8x64xi1>
    %11 = arith.andi %9, %10 : vector<8x64xi1>
    %cst = arith.constant 1.000000e+00 : f32
    %cst_2 = arith.constant 0.000000e+00 : f32
    %12 = vector.broadcast %cst : f32 to vector<8x64xf32>
    %13 = vector.broadcast %cst_2 : f32 to vector<8x64xf32>
    %14 = arith.select %11, %12, %13 : vector<8x64xi1>, vector<8x64xf32>
    %c0_3 = arith.constant 0 : index
    %c0_4 = arith.constant 0 : index
    %15 = vector.load %arg4[%c0_3, %c0_4] : memref<64x128xf32, #tpu.memory_space<vmem>>, vector<64x128xf32>
    %cst_5 = arith.constant dense<0.000000e+00> : vector<8x128xf32>
    %16 = tpu.matmul %14, %15, %cst_5 {dimension_numbers = #tpu.dot_dimension_numbers<[1], [0], [0], [1], [0, 0, 1, 1], [], []>} : vector<8x64xf32>, vector<64x128xf32>, vector<8x128xf32> -> vector<8x128xf32>
    %c0_6 = arith.constant 0 : index
    %c0_7 = arith.constant 0 : index
    %17 = vector.load %arg5[%c0_6, %c0_7] : memref<8x128xf32, #tpu.memory_space<vmem>>, vector<8x128xf32>
    %c0_8 = arith.constant 0 : index
    %c0_9 = arith.constant 0 : index
    %c0_10 = arith.constant 0 : index
    %18 = vector.load %arg3[%c0_8, %c0_9, %c0_10] : memref<1x8x1xi32, #tpu.memory_space<vmem>>, vector<1x8x1xi32>
    %19 = vector.shape_cast %18 : vector<1x8x1xi32> to vector<8x1xi32>
    %c0_11 = arith.constant 0 : index
    %c0_12 = arith.constant 0 : index
    %20 = vector.load %arg6[%c0_11, %c0_12] : memref<4x128xf32, #tpu.memory_space<vmem>>, vector<4x128xf32>
    %21 = arith.addf %16, %17 : vector<8x128xf32>
    %22 = vector.extract_strided_slice %20 {offsets = [0, 0], sizes = [1, 128], strides = [1, 1]} : vector<4x128xf32> to vector<1x128xf32>
    %23 = vector.shape_cast %22 : vector<1x128xf32> to vector<128xf32>
    %24 = vector.shape_cast %23 : vector<128xf32> to vector<1x128xf32>
    %c0_i32_13 = arith.constant 0 : i32
    %25 = vector.broadcast %c0_i32_13 : i32 to vector<8x1xi32>
    %26 = arith.cmpi eq, %19, %25 : vector<8x1xi32>
    %cst_14 = arith.constant 0.000000e+00 : f32
    %27 = vector.broadcast %cst_14 : f32 to vector<1x128xf32>
    %28 = vector.shape_cast %26 : vector<8x1xi1> to vector<8x1xi1>
    %29 = vector.broadcast %28 : vector<8x1xi1> to vector<8x128xi1>
    %30 = vector.shape_cast %24 : vector<1x128xf32> to vector<1x128xf32>
    %31 = vector.broadcast %30 : vector<1x128xf32> to vector<8x128xf32>
    %32 = vector.shape_cast %27 : vector<1x128xf32> to vector<1x128xf32>
    %33 = vector.broadcast %32 : vector<1x128xf32> to vector<8x128xf32>
    %34 = arith.select %29, %31, %33 : vector<8x128xi1>, vector<8x128xf32>
    %35 = arith.addf %21, %34 : vector<8x128xf32>
    %36 = vector.extract_strided_slice %20 {offsets = [1, 0], sizes = [1, 128], strides = [1, 1]} : vector<4x128xf32> to vector<1x128xf32>
    %37 = vector.shape_cast %36 : vector<1x128xf32> to vector<128xf32>
    %38 = vector.shape_cast %37 : vector<128xf32> to vector<1x128xf32>
    %c1_i32 = arith.constant 1 : i32
    %39 = vector.broadcast %c1_i32 : i32 to vector<8x1xi32>
    %40 = arith.cmpi eq, %19, %39 : vector<8x1xi32>
    %cst_15 = arith.constant 0.000000e+00 : f32
    %41 = vector.broadcast %cst_15 : f32 to vector<1x128xf32>
    %42 = vector.shape_cast %40 : vector<8x1xi1> to vector<8x1xi1>
    %43 = vector.broadcast %42 : vector<8x1xi1> to vector<8x128xi1>
    %44 = vector.shape_cast %38 : vector<1x128xf32> to vector<1x128xf32>
    %45 = vector.broadcast %44 : vector<1x128xf32> to vector<8x128xf32>
    %46 = vector.shape_cast %41 : vector<1x128xf32> to vector<1x128xf32>
    %47 = vector.broadcast %46 : vector<1x128xf32> to vector<8x128xf32>
    %48 = arith.select %43, %45, %47 : vector<8x128xi1>, vector<8x128xf32>
    %49 = arith.addf %35, %48 : vector<8x128xf32>
    %50 = vector.extract_strided_slice %20 {offsets = [2, 0], sizes = [1, 128], strides = [1, 1]} : vector<4x128xf32> to vector<1x128xf32>
    %51 = vector.shape_cast %50 : vector<1x128xf32> to vector<128xf32>
    %52 = vector.shape_cast %51 : vector<128xf32> to vector<1x128xf32>
    %c2_i32 = arith.constant 2 : i32
    %53 = vector.broadcast %c2_i32 : i32 to vector<8x1xi32>
    %54 = arith.cmpi eq, %19, %53 : vector<8x1xi32>
    %cst_16 = arith.constant 0.000000e+00 : f32
    %55 = vector.broadcast %cst_16 : f32 to vector<1x128xf32>
    %56 = vector.shape_cast %54 : vector<8x1xi1> to vector<8x1xi1>
    %57 = vector.broadcast %56 : vector<8x1xi1> to vector<8x128xi1>
    %58 = vector.shape_cast %52 : vector<1x128xf32> to vector<1x128xf32>
    %59 = vector.broadcast %58 : vector<1x128xf32> to vector<8x128xf32>
    %60 = vector.shape_cast %55 : vector<1x128xf32> to vector<1x128xf32>
    %61 = vector.broadcast %60 : vector<1x128xf32> to vector<8x128xf32>
    %62 = arith.select %57, %59, %61 : vector<8x128xi1>, vector<8x128xf32>
    %63 = arith.addf %49, %62 : vector<8x128xf32>
    %64 = vector.extract_strided_slice %20 {offsets = [3, 0], sizes = [1, 128], strides = [1, 1]} : vector<4x128xf32> to vector<1x128xf32>
    %65 = vector.shape_cast %64 : vector<1x128xf32> to vector<128xf32>
    %66 = vector.shape_cast %65 : vector<128xf32> to vector<1x128xf32>
    %c3_i32 = arith.constant 3 : i32
    %67 = vector.broadcast %c3_i32 : i32 to vector<8x1xi32>
    %68 = arith.cmpi eq, %19, %67 : vector<8x1xi32>
    %cst_17 = arith.constant 0.000000e+00 : f32
    %69 = vector.broadcast %cst_17 : f32 to vector<1x128xf32>
    %70 = vector.shape_cast %68 : vector<8x1xi1> to vector<8x1xi1>
    %71 = vector.broadcast %70 : vector<8x1xi1> to vector<8x128xi1>
    %72 = vector.shape_cast %66 : vector<1x128xf32> to vector<1x128xf32>
    %73 = vector.broadcast %72 : vector<1x128xf32> to vector<8x128xf32>
    %74 = vector.shape_cast %69 : vector<1x128xf32> to vector<1x128xf32>
    %75 = vector.broadcast %74 : vector<1x128xf32> to vector<8x128xf32>
    %76 = arith.select %71, %73, %75 : vector<8x128xi1>, vector<8x128xf32>
    %77 = arith.addf %63, %76 : vector<8x128xf32>
    %c0_18 = arith.constant 0 : index
    %c0_19 = arith.constant 0 : index
    %c0_20 = arith.constant 0 : index
    %78 = vector.load %arg7[%c0_18, %c0_19, %c0_20] : memref<1x8x128xf32, #tpu.memory_space<vmem>>, vector<1x8x128xf32>
    %79 = vector.shape_cast %78 : vector<1x8x128xf32> to vector<8x128xf32>
    %80 = vector.shape_cast %77 : vector<8x128xf32> to vector<1x8x128xf32>
    tpu.vector_store %arg7[%c0_18, %c0_19, %c0_20], %80 {strides = array<i32>} : memref<1x8x128xf32, #tpu.memory_space<vmem>>, vector<1x8x128xf32>,
    return
  }
  func.func @transform_0(%arg0: i32, %arg1: i32) -> (i32, i32, i32) {
    %c0_i32 = arith.constant 0 : i32
    %c0_i32_0 = arith.constant 0 : i32
    return %arg1, %arg0, %c0_i32 : i32, i32, i32
  }
  func.func @transform_1(%arg0: i32, %arg1: i32) -> (i32, i32, i32) {
    %c0_i32 = arith.constant 0 : i32
    %c0_i32_0 = arith.constant 0 : i32
    return %arg1, %arg0, %c0_i32 : i32, i32, i32
  }
  func.func @transform_2(%arg0: i32, %arg1: i32) -> (i32, i32) {
    %c0_i32 = arith.constant 0 : i32
    %c0_i32_0 = arith.constant 0 : i32
    %c0_i32_1 = arith.constant 0 : i32
    return %c0_i32, %c0_i32_0 : i32, i32
  }
  func.func @transform_3(%arg0: i32, %arg1: i32) -> (i32, i32) {
    %c0_i32 = arith.constant 0 : i32
    %c0_i32_0 = arith.constant 0 : i32
    return %arg0, %c0_i32 : i32, i32
  }
  func.func @transform_4(%arg0: i32, %arg1: i32) -> (i32, i32) {
    %c0_i32 = arith.constant 0 : i32
    %c0_i32_0 = arith.constant 0 : i32
    %c0_i32_1 = arith.constant 0 : i32
    return %c0_i32, %c0_i32_0 : i32, i32
  }
  func.func @transform_5(%arg0: i32, %arg1: i32) -> (i32, i32, i32) {
    %c0_i32 = arith.constant 0 : i32
    %c0_i32_0 = arith.constant 0 : i32
    return %arg1, %arg0, %c0_i32 : i32, i32, i32
  }
}

</mosaic_0001>

<llo_original>
// kernel: tpu_custom_call.1
$region0: #{tpu_custom_call.1}
  #allocation0 [shape = 'u32[]', space=smem, size = 0x4, offset = 0x4, fixed_abs, tag = 'smem constant byte address 0x4 - core index']
  #allocation1 [shape = 'u32[144,128]{1,0:T(1,128)}', space=vmem, size = 0x12000, scoped, tag = 'internal scratch']
  %s0 = inlined_call_operand.vmem [shape: s32[2,8,1], index: 0, kind: input, shape index: {}]
  %s1 = inlined_call_operand.vmem [shape: s32[2,8,1], index: 1, kind: input, shape index: {}]
  %s2 = inlined_call_operand.hbm [shape: f32[64,128], index: 2, kind: input, shape index: {}]
  %s3 = inlined_call_operand.vmem [shape: f32[8,128], index: 3, kind: input, shape index: {}]
  %s4 = inlined_call_operand.vmem [shape: f32[4,128], index: 4, kind: input, shape index: {}]
  %s5 = inlined_call_operand.hbm [shape: f32[2,8,128], index: 5, kind: output, shape index: {}]
  %s6 = sld [smem:[#allocation0]]
  $region57: #{tpu_custom_call.1} parent=0
    _
  %s8 = ssub.s32 1, %s6
  %s9 = scalar_select 0, %s8, %s6
  $region1: #{tpu_custom_call.1} parent=0
    #allocation2 [shape = 'u8[32768]{0}', space=vmem, size = 0x8000, scoped, tag = 'input window, operand 2, single buffered']
    #allocation3 [shape = 's32[2]{0}', space=sflag, size = 0x8, scoped, tag = 'scoped memory for tpu_custom_call.1']
    #allocation4 [shape = 's32[2]{0}', space=sflag, size = 0x8, scoped, tag = 'scoped memory for tpu_custom_call.1']
    #allocation5 [shape = 'u8[8192]{0}', space=vmem, size = 0x2000, scoped, tag = 'output window, operand 0']
    %10 = vsyncpa [#allocation3], 0
    %11 = vsyncpa [#allocation4], 0
    %s12 = scalar_lea.sflag [#allocation4], 1
    %13 = vsyncpa %s12, 0
    loop: start=0, step=1, limit=4
    $region2: #{tpu_custom_call.1} parent=1 // loop_pre_header
      _
    $region3: #{tpu_custom_call.1} parent=1 // loop_header
      %s15 = sphi 0, %s19
      %p16 = scmp.ge.s32.totalorder %s15, 4
      %s22 = sphi 0, %s34
      %s23 = sphi 0, %s30
      %s24 = sphi 0, %s22
      %s25 = sphi 0, %s23
      %s26 = sphi 0, %s24
      %s27 = sphi 0, %s25
      %s39 = sphi 0, %s41
      %s42 = sphi 0, %s39
      %s43 = sphi 0, %s42
      %s59 = sphi 0, %s43
      %s67 = sphi 0, %s69
      %s70 = sphi 0, %s67
      %s71 = sphi 0, %s70
      %s87 = sphi 0, %s71
      %s91 = sphi 0, %s91
      %s93 = sphi 0, %s91
      %s94 = sphi 0, %s93
      %s108 = sphi 0, %s94
      %s114 = sphi 0, %s116
      %s117 = sphi 0, %s114
      %s118 = sphi 0, %s117
      %s134 = sphi 0, %s118
      %s138 = sphi 0, %s138
      %s140 = sphi 0, %s138
      %s141 = sphi 0, %s140
      %s155 = sphi 0, %s141
      %s163 = sphi 0, %s165
      %s166 = sphi 0, %s163
      %s167 = sphi 0, %s166
      %s183 = sphi 0, %s167
    $region4: #{tpu_custom_call.1} parent=1 // loop_header_branch
      %18 = sbr.rel (%p16) target = $region8
    $region5: #{tpu_custom_call.1} parent=1 // loop_body
      %s20 = ssub.s32 %s15, 1
      %s21 = ssub.s32 %s15, 2
      %s28 = sadd.s32 1, %s23
      %p29 = scmp.ge.s32.totalorder %s28, 2
      %s30 = scalar_select %p29, 0, %s28
      %s31 = sadd.s32 1, %s22
      %s32 = scalar_select %p29, %s31, %s22
      %p33 = scmp.ge.s32.totalorder %s32, 1
      %s34 = scalar_select %p33, 0, %s32
      %s35 = ssub.s32 %s23, %s30
      %s36 = ssub.s32 %s22, %s34
      %s37 = sor.u32 %s35, %s36
      %p38 = scmp.eq.s32.totalorder %s37, 0
      %s40 = sadd.s32 %s39, 1
      %s41 = scalar_select %p38, %s39, %s40
      %p44 = pneg %p38
      %p45 = scmp.eq.s32.totalorder %s15, 1
      %p46 = por %p44, %p45
      %p47 = scmp.ne.s32.totalorder %s39, %s42
      %p48 = scmp.eq.s32.totalorder %s15, 0
      %p49 = por %p47, %p48
      %p50 = scmp.ne.s32.totalorder %s39, %s42
      %p51 = scmp.eq.s32.totalorder %s20, 1
      %p52 = por %p50, %p51
      %p53 = scmp.ne.s32.totalorder %s42, %s43
      %p54 = scmp.eq.s32.totalorder %s20, 0
      %p55 = por %p53, %p54
      %p56 = scmp.ne.s32.totalorder %s42, %s43
      %p57 = scmp.eq.s32.totalorder %s21, 1
      %p58 = por %p56, %p57
      %p60 = scmp.ne.s32.totalorder %s43, %s59
      %p61 = scmp.eq.s32.totalorder %s21, 0
      %p62 = por %p60, %p61
      %s63 = ssub.s32 %s23, %s30
      %s64 = ssub.s32 %s22, %s34
      %s65 = sor.u32 %s63, %s64
      %p66 = scmp.eq.s32.totalorder %s65, 0
      %s68 = sadd.s32 %s67, 1
      %s69 = scalar_select %p66, %s67, %s68
      %p72 = pneg %p66
      %p73 = scmp.eq.s32.totalorder %s15, 1
      %p74 = por %p72, %p73
      %p75 = scmp.ne.s32.totalorder %s67, %s70
      %p76 = scmp.eq.s32.totalorder %s15, 0
      %p77 = por %p75, %p76
      %p78 = scmp.ne.s32.totalorder %s67, %s70
      %p79 = scmp.eq.s32.totalorder %s20, 1
      %p80 = por %p78, %p79
      %p81 = scmp.ne.s32.totalorder %s70, %s71
      %p82 = scmp.eq.s32.totalorder %s20, 0
      %p83 = por %p81, %p82
      %p84 = scmp.ne.s32.totalorder %s70, %s71
      %p85 = scmp.eq.s32.totalorder %s21, 1
      %p86 = por %p84, %p85
      %p88 = scmp.ne.s32.totalorder %s71, %s87
      %p89 = scmp.eq.s32.totalorder %s21, 0
      %p90 = por %p88, %p89
      %s92 = sadd.s32 %s91, 1
      %p95 = scmp.eq.s32.totalorder %s15, 1
      %p96 = scmp.ne.s32.totalorder %s91, %s93
      %p97 = scmp.eq.s32.totalorder %s15, 0
      %p98 = por %p96, %p97
      %p99 = scmp.ne.s32.totalorder %s91, %s93
      %p100 = scmp.eq.s32.totalorder %s20, 1
      %p101 = por %p99, %p100
      %p102 = scmp.ne.s32.totalorder %s93, %s94
      %p103 = scmp.eq.s32.totalorder %s20, 0
      %p104 = por %p102, %p103
      %p105 = scmp.ne.s32.totalorder %s93, %s94
      %p106 = scmp.eq.s32.totalorder %s21, 1
      %p107 = por %p105, %p106
      %p109 = scmp.ne.s32.totalorder %s94, %s108
      %p110 = scmp.eq.s32.totalorder %s21, 0
      %p111 = por %p109, %p110
      %s112 = ssub.s32 %s22, %s34
      %p113 = scmp.eq.s32.totalorder %s112, 0
      %s115 = sadd.s32 %s114, 1
      %s116 = scalar_select %p113, %s114, %s115
      %p119 = pneg %p113
      %p120 = scmp.eq.s32.totalorder %s15, 1
      %p121 = por %p119, %p120
      %p122 = scmp.ne.s32.totalorder %s114, %s117
      %p123 = scmp.eq.s32.totalorder %s15, 0
      %p124 = por %p122, %p123
      %p125 = scmp.ne.s32.totalorder %s114, %s117
      %p126 = scmp.eq.s32.totalorder %s20, 1
      %p127 = por %p125, %p126
      %p128 = scmp.ne.s32.totalorder %s117, %s118
      %p129 = scmp.eq.s32.totalorder %s20, 0
      %p130 = por %p128, %p129
      %p131 = scmp.ne.s32.totalorder %s117, %s118
      %p132 = scmp.eq.s32.totalorder %s21, 1
      %p133 = por %p131, %p132
      %p135 = scmp.ne.s32.totalorder %s118, %s134
      %p136 = scmp.eq.s32.totalorder %s21, 0
      %p137 = por %p135, %p136
      %s139 = sadd.s32 %s138, 1
      %p142 = scmp.eq.s32.totalorder %s15, 1
      %p143 = scmp.ne.s32.totalorder %s138, %s140
      %p144 = scmp.eq.s32.totalorder %s15, 0
      %p145 = por %p143, %p144
      %p146 = scmp.ne.s32.totalorder %s138, %s140
      %p147 = scmp.eq.s32.totalorder %s20, 1
      %p148 = por %p146, %p147
      %p149 = scmp.ne.s32.totalorder %s140, %s141
      %p150 = scmp.eq.s32.totalorder %s20, 0
      %p151 = por %p149, %p150
      %p152 = scmp.ne.s32.totalorder %s140, %s141
      %p153 = scmp.eq.s32.totalorder %s21, 1
      %p154 = por %p152, %p153
      %p156 = scmp.ne.s32.totalorder %s141, %s155
      %p157 = scmp.eq.s32.totalorder %s21, 0
      %p158 = por %p156, %p157
      %s159 = ssub.s32 %s23, %s30
      %s160 = ssub.s32 %s22, %s34
      %s161 = sor.u32 %s159, %s160
      %p162 = scmp.eq.s32.totalorder %s161, 0
      %s164 = sadd.s32 %s163, 1
      %s165 = scalar_select %p162, %s163, %s164
      %p168 = pneg %p162
      %p169 = scmp.eq.s32.totalorder %s15, 1
      %p170 = por %p168, %p169
      %p171 = scmp.ne.s32.totalorder %s163, %s166
      %p172 = scmp.eq.s32.totalorder %s15, 0
      %p173 = por %p171, %p172
      %p174 = scmp.ne.s32.totalorder %s163, %s166
      %p175 = scmp.eq.s32.totalorder %s20, 1
      %p176 = por %p174, %p175
      %p177 = scmp.ne.s32.totalorder %s166, %s167
      %p178 = scmp.eq.s32.totalorder %s20, 0
      %p179 = por %p177, %p178
      %p180 = scmp.ne.s32.totalorder %s166, %s167
      %p181 = scmp.eq.s32.totalorder %s21, 1
      %p182 = por %p180, %p181
      %p184 = scmp.ne.s32.totalorder %s167, %s183
      %p185 = scmp.eq.s32.totalorder %s21, 0
      %p186 = por %p184, %p185
      %p187 = scmp.le.s32.totalorder 1, %s15
      %p188 = scmp.lt.s32.totalorder %s15, 3
      %p189 = pnand %p187, %p188
      %p190 = pneg %p189
      // Predicated region
      $region9: #{tpu_custom_call.1} parent=5 // pred_check
        _
      $region10: #{tpu_custom_call.1} parent=5 // pred_check_branch
        %192 = sbr.rel (%p189) target = $region12
      $region11: #{tpu_custom_call.1} parent=5 // pred_region
        %s193 = ssub.s32 %s15, 1
        // Predicated region
        $region13: #{tpu_custom_call.1} parent=11 // pred_check
          %p194 = pneg %p104
        $region14: #{tpu_custom_call.1} parent=11 // pred_check_branch
          %196 = sbr.rel (%p194) target = $region16
        $region15: #{tpu_custom_call.1} parent=11 // pred_region
          %s198 = ssub.s32 1024, 1024
          %199 = vsyncadd [#allocation3], %s198
          %s200 = sshll.u32 [#allocation2], 4
          %s201 = int_to_ptr.vmem [resolvable:$true] %s200
          %206 = dma.hbm_to_vmem [thread:$0]  %s2, 1024, %s201, [#allocation3], 128, 128, 8
        $region16: #{tpu_custom_call.1} parent=11 // pred_fallthru
          _
        // Predicated region
        $region17: #{tpu_custom_call.1} parent=11 // pred_check
          %p207 = pneg %p130
        $region18: #{tpu_custom_call.1} parent=11 // pred_check_branch
          %209 = sbr.rel (%p207) target = $region20
        $region19: #{tpu_custom_call.1} parent=11 // pred_region
          %p210 = scmp.lt.s32.totalorder %s24, 0
          %s211 = scalar_select %p210, %s24, 0
          %s212 = smul.addr %s211, 8
          %s213 = scalar_lea.vmem %s3, %s212
        $region20: #{tpu_custom_call.1} parent=11 // pred_fallthru
          _
        // Predicated region
        $region21: #{tpu_custom_call.1} parent=11 // pred_check
          %p214 = pneg %p151
        $region22: #{tpu_custom_call.1} parent=11 // pred_check_branch
          %216 = sbr.rel (%p214) target = $region24
        $region23: #{tpu_custom_call.1} parent=11 // pred_region
          _
        $region24: #{tpu_custom_call.1} parent=11 // pred_fallthru
          _
      $region12: #{tpu_custom_call.1} parent=5 // pred_fallthru
        _
      %p217 = scmp.lt.s32.totalorder %s15, 2
      // Predicated region
      $region25: #{tpu_custom_call.1} parent=5 // pred_check
        %p218 = pneg %p217
      $region26: #{tpu_custom_call.1} parent=5 // pred_check_branch
        %220 = sbr.rel (%p218) target = $region28
      $region27: #{tpu_custom_call.1} parent=5 // pred_region
        // Predicated region
        $region29: #{tpu_custom_call.1} parent=27 // pred_check
          %p221 = pneg %p49
        $region30: #{tpu_custom_call.1} parent=27 // pred_check_branch
          %223 = sbr.rel (%p221) target = $region32
        $region31: #{tpu_custom_call.1} parent=27 // pred_region
          %p224 = scmp.lt.s32.totalorder %s23, 1
          %s225 = scalar_select %p224, %s23, 1
          %p226 = scmp.lt.s32.totalorder %s22, 0
          %s227 = scalar_select %p226, %s22, 0
          %s228 = sadd.s32 %s227, %s225
          %s229 = smul.addr %s228, 8
          %s230 = scalar_lea.vmem %s0, %s229
        $region32: #{tpu_custom_call.1} parent=27 // pred_fallthru
          _
        // Predicated region
        $region33: #{tpu_custom_call.1} parent=27 // pred_check
          %p231 = pneg %p77
        $region34: #{tpu_custom_call.1} parent=27 // pred_check_branch
          %233 = sbr.rel (%p231) target = $region36
        $region35: #{tpu_custom_call.1} parent=27 // pred_region
          %p234 = scmp.lt.s32.totalorder %s23, 1
          %s235 = scalar_select %p234, %s23, 1
          %p236 = scmp.lt.s32.totalorder %s22, 0
          %s237 = scalar_select %p236, %s22, 0
          %s238 = sadd.s32 %s237, %s235
          %s239 = smul.addr %s238, 8
          %s240 = scalar_lea.vmem %s1, %s239
        $region36: #{tpu_custom_call.1} parent=27 // pred_fallthru
          _
      $region28: #{tpu_custom_call.1} parent=5 // pred_fallthru
        _
      %p241 = scmp.le.s32.totalorder 1, %s15
      %p242 = scmp.lt.s32.totalorder %s15, 3
      %p243 = pnand %p241, %p242
      %p244 = pneg %p243
      // Predicated region
      $region37: #{tpu_custom_call.1} parent=5 // pred_check
        _
      $region38: #{tpu_custom_call.1} parent=5 // pred_check_branch
        %246 = sbr.rel (%p243) target = $region40
      $region39: #{tpu_custom_call.1} parent=5 // pred_region
        %s247 = ssub.s32 %s15, 1
        // Predicated region
        $region41: #{tpu_custom_call.1} parent=39 // pred_check
          %p248 = pneg %p104
        $region42: #{tpu_custom_call.1} parent=39 // pred_check_branch
          %250 = sbr.rel (%p248) target = $region44
        $region43: #{tpu_custom_call.1} parent=39 // pred_region
          %251 = dma.done [#allocation3], 1024
        $region44: #{tpu_custom_call.1} parent=39 // pred_fallthru
          _
        %p252 = scmp.lt.s32.totalorder %s25, 1
        %s253 = scalar_select %p252, %s25, 1
        %p254 = scmp.lt.s32.totalorder %s24, 0
        %s255 = scalar_select %p254, %s24, 0
        %s256 = sadd.s32 %s255, %s253
        %s257 = smul.addr %s256, 8
        %s258 = scalar_lea.vmem %s0, %s257
        %p259 = pneg %p55
        %p260 = pneg %p52
        %p261 = scmp.lt.s32.totalorder %s25, 1
        %s262 = scalar_select %p261, %s25, 1
        %p263 = scmp.lt.s32.totalorder %s24, 0
        %s264 = scalar_select %p263, %s24, 0
        %s265 = sadd.s32 %s264, %s262
        %s266 = smul.addr %s265, 8
        %s267 = scalar_lea.vmem %s1, %s266
        %p268 = pneg %p83
        %p269 = pneg %p80
        %p270 = pneg %p104
        %p271 = pneg %p101
        %p272 = scmp.lt.s32.totalorder %s24, 0
        %s273 = scalar_select %p272, %s24, 0
        %s274 = smul.addr %s273, 8
        %s275 = scalar_lea.vmem %s3, %s274
        %p276 = pneg %p130
        %p277 = pneg %p127
        %p278 = pneg %p151
        %p279 = pneg %p148
        %p280 = pneg %p179
        %p281 = pneg %p176
        %s282 = sand.u32 %s166, 1
        %s283 = scalar_lea.sflag [#allocation4], %s282
        %s284 = sand.u32 %s166, 1
        %s285 = smul.addr %s284, 8
        %s286 = scalar_lea.vmem [#allocation5], %s285
        %p287 = scmp.lt.s32.totalorder %s25, 1
        %s288 = scalar_select %p287, %s25, 1
        %p289 = scmp.lt.s32.totalorder %s24, 0
        %s290 = scalar_select %p289, %s24, 0
        %s291 = sadd.s32 %s290, %s288
        %s292 = smul.addr %s291, 8
        %s293 = scalar_lea.vmem %s0, %s292
        %p294 = scmp.lt.s32.totalorder %s25, 1
        %s295 = scalar_select %p294, %s25, 1
        %p296 = scmp.lt.s32.totalorder %s24, 0
        %s297 = scalar_select %p296, %s24, 0
        %s298 = sadd.s32 %s297, %s295
        %s299 = smul.addr %s298, 8
        %s300 = scalar_lea.vmem %s1, %s299
        %p301 = scmp.lt.s32.totalorder %s24, 0
        %s302 = scalar_select %p301, %s24, 0
        %s303 = smul.addr %s302, 8
        %s304 = scalar_lea.vmem %s3, %s303
        %v305 = vld [vmem:[%s293] sm:$0xff]
        %vm306 = vcmp.ge.s32.totalorder %v305, 0
        %vm307 = vcmp.lt.s32.totalorder %v305, 64
        %vm308 = vmand %vm306, %vm307
        %v309 = vlaneseq
        %v310 = vand.u32 %v309, 127
        %311 = vset.pattern.permute.xlu0 0
        %312 = vperm.xlu0 %311, %v305
        %v313 = vpop.permute.xlu0 %312
        %vm314 = vcmp.eq.s32.totalorder %v310, %v313
        %v315 = vsel %vm308, 1, 0
        %316 = vset.pattern.permute.xlu0 0
        %317 = vperm.xlu0 %316, %v315
        %v318 = vpop.permute.xlu0 %317
        %vm319 = vcmp.eq.s32.totalorder %v318, 1
        %vm320 = vmand %vm314, %vm319
        %v321 = vsel %vm320, 1.0, 0.0
        %v322 = vld [vmem:[#allocation2] sm:$0xff]
        %v323 = vld [vmem:[#allocation2 + $0x8] sm:$0xff]
        %v324 = vld [vmem:[#allocation2 + $0x10] sm:$0xff]
        %v325 = vld [vmem:[#allocation2 + $0x18] sm:$0xff]
        %v326 = vld [vmem:[#allocation2 + $0x20] sm:$0xff]
        %v327 = vld [vmem:[#allocation2 + $0x28] sm:$0xff]
        %v328 = vld [vmem:[#allocation2 + $0x30] sm:$0xff]
        %v329 = vld [vmem:[#allocation2 + $0x38] sm:$0xff]
        %v330 = vld [vmem:[%s304] sm:$0xff]
        %v331 = vld [vmem:[%s300] sm:$0xff]
        %v332 = vld [vmem:[%s4] sm:$0xf]
        %vm333 = vcmask 523264
        %v335 = vsel %vm333, %v321, 0
        %337 = vmatprep.subr.mxu0 0.0
        %338 = vmatpush1.msra.mxu0 %v322
        %339 = vmatprep.subr.mxu0 0.0
        %340 = vmatpush1.msra.mxu0 %v323
        %341 = vmatprep.subr.mxu0 0.0
        %342 = vmatpush1.msra.mxu0 %v324
        %343 = vmatprep.subr.mxu0 0.0
        %344 = vmatpush1.msra.mxu0 %v325
        %345 = vmatprep.subr.mxu0 0.0
        %346 = vmatpush1.msra.mxu0 %v326
        %347 = vmatprep.subr.mxu0 0.0
        %348 = vmatpush1.msra.mxu0 %v327
        %349 = vmatprep.subr.mxu0 0.0
        %350 = vmatpush1.msra.mxu0 %v328
        %351 = vmatprep.subr.mxu0 0.0
        %352 = vmatpush1.msra.mxu0 %v329
        %353 = vmatprep.subr.mxu0 0.0
        %354 = vmatpush1.msra.mxu0 0.0
        %355 = vmatprep.subr.mxu0 0.0
        %356 = vmatpush1.msra.mxu0 0.0
        %357 = vmatprep.subr.mxu0 0.0
        %358 = vmatpush1.msra.mxu0 0.0
        %359 = vmatprep.subr.mxu0 0.0
        %360 = vmatpush1.msra.mxu0 0.0
        %361 = vmatprep.subr.mxu0 0.0
        %362 = vmatpush1.msra.mxu0 0.0
        %363 = vmatprep.subr.mxu0 0.0
        %364 = vmatpush1.msra.mxu0 0.0
        %365 = vmatprep.subr.mxu0 0.0
        %366 = vmatpush1.msra.mxu0 0.0
        %367 = vmatprep.subr.mxu0 0.0
        %368 = vmatpush1.msra.mxu0 0.0
        %369 = vmatprep.subr.mxu0 0.0
        %370 = vmatpush1.msra.mxu0 0.0
        %371 = vmatprep.subr.mxu0 0.0
        %372 = vmatpush1.msra.mxu0 0.0
        %373 = vmatprep.subr.mxu0 0.0
        %374 = vmatpush1.msra.mxu0 0.0
        %375 = vmatprep.subr.mxu0 0.0
        %376 = vmatpush1.msra.mxu0 0.0
        %377 = vmatprep.subr.mxu0 0.0
        %378 = vmatpush1.msra.mxu0 0.0
        %379 = vmatprep.subr.mxu0 0.0
        %380 = vmatpush1.msra.mxu0 0.0
        %381 = vmatprep.subr.mxu0 0.0
        %382 = vmatpush1.msra.mxu0 0.0
        %383 = vmatprep.subr.mxu0 0.0
        %384 = vmatpush1.msra.mxu0 0.0
        %385 = vmatprep.subr.mxu0 0.0
        %386 = vmatpush1.msra.mxu0 0.0
        %387 = vmatprep.subr.mxu0 0.0
        %388 = vmatpush1.msra.mxu0 0.0
        %389 = vmatprep.subr.mxu0 0.0
        %390 = vmatpush1.msra.mxu0 0.0
        %391 = vmatprep.subr.mxu0 0.0
        %392 = vmatpush1.msra.mxu0 0.0
        %393 = vmatprep.subr.mxu0 0.0
        %394 = vmatpush1.msra.mxu0 0.0
        %395 = vmatprep.subr.mxu0 0.0
        %396 = vmatpush1.msra.mxu0 0.0
        %397 = vmatprep.subr.mxu0 0.0
        %398 = vmatpush1.msra.mxu0 0.0
        %399 = vmatprep.subr.mxu0 0.0
        %400 = vmatpush1.msra.mxu0 0.0
        %401 = vmatprep.mubr.f32.mxu0 0.0
        %402 = vmatmul.mubr.f32.gmra.mrb[0].mxu0 %v335
        %v403 = vpop.f32.mrb[0].mxu0
        %v404 = vadd.f32 %v330, %v403
        %v405 = vpop.f32.mrb[0].mxu0
        %406 = vdwg.mxu0
        %vm407 = vcmp.eq.s32.totalorder %v331, 0
        %v408 = vsel %vm407, 1, 0
        %409 = vset.pattern.permute.xlu0 0
        %410 = vperm.xlu0 %409, %v408
        %v411 = vpop.permute.xlu0 %410
        %vm412 = vcmp.eq.s32.totalorder %v411, 1
        %v413 = vlaneseq
        %v414 = vshrl.u32 %v413, 7
        %v415 = vsub.s32 0, %v414
        %v416 = vrot.slane %v332, %v415
        %v417 = vsel %vm412, %v416, 0.0
        %v418 = vadd.f32 %v404, %v417
        %vm419 = vcmp.eq.s32.totalorder %v331, 1
        %v420 = vsel %vm419, 1, 0
        %421 = vset.pattern.permute.xlu0 0
        %422 = vperm.xlu0 %421, %v420
        %v423 = vpop.permute.xlu0 %422
        %vm424 = vcmp.eq.s32.totalorder %v423, 1
        %v425 = vlaneseq
        %v426 = vshrl.u32 %v425, 7
        %v427 = vsub.s32 1, %v426
        %v428 = vrot.slane %v332, %v427
        %v429 = vsel %vm424, %v428, 0.0
        %v430 = vadd.f32 %v418, %v429
        %vm431 = vcmp.eq.s32.totalorder %v331, 2
        %v432 = vsel %vm431, 1, 0
        %433 = vset.pattern.permute.xlu0 0
        %434 = vperm.xlu0 %433, %v432
        %v435 = vpop.permute.xlu0 %434
        %vm436 = vcmp.eq.s32.totalorder %v435, 1
        %v437 = vlaneseq
        %v438 = vshrl.u32 %v437, 7
        %v439 = vsub.s32 2, %v438
        %v440 = vrot.slane %v332, %v439
        %v441 = vsel %vm436, %v440, 0.0
        %v442 = vadd.f32 %v430, %v441
        %vm443 = vcmp.eq.s32.totalorder %v331, 3
        %v444 = vsel %vm443, 1, 0
        %445 = vset.pattern.permute.xlu0 0
        %446 = vperm.xlu0 %445, %v444
        %v447 = vpop.permute.xlu0 %446
        %vm448 = vcmp.eq.s32.totalorder %v447, 1
        %v449 = vlaneseq
        %v450 = vshrl.u32 %v449, 7
        %v451 = vsub.s32 3, %v450
        %v452 = vrot.slane %v332, %v451
        %v453 = vsel %vm448, %v452, 0.0
        %v454 = vadd.f32 %v442, %v453
        %455 = vst [vmem:[%s286] sm:$0xff] %v454
        %s456 = sand.u32 %s166, 1
        %s457 = scalar_lea.sflag [#allocation4], %s456
        %s458 = sand.u32 %s166, 1
        %s459 = smul.addr %s458, 8
        %s460 = scalar_lea.vmem [#allocation5], %s459
        // Predicated region
        $region45: #{tpu_custom_call.1} parent=39 // pred_check
          %p461 = pneg %p176
        $region46: #{tpu_custom_call.1} parent=39 // pred_check_branch
          %463 = sbr.rel (%p461) target = $region48
        $region47: #{tpu_custom_call.1} parent=39 // pred_region
          %s465 = ssub.s32 128, 128
          %466 = vsyncadd %s457, %s465
          %s467 = sadd.s32 %s24, %s25
          %s468 = smul.addr %s467, 128
          %s469 = scalar_lea.hbm %s5, %s468
          %s471 = sshll.u32 %s460, 4
          %s472 = int_to_ptr.vmem [resolvable:$true] %s471
          %474 = dma.vmem_to_hbm [thread:$0]  %s472, 128, %s469, %s457
        $region48: #{tpu_custom_call.1} parent=39 // pred_fallthru
          _
      $region40: #{tpu_custom_call.1} parent=5 // pred_fallthru
        _
      %p475 = scmp.le.s32.totalorder 2, %s15
      // Predicated region
      $region49: #{tpu_custom_call.1} parent=5 // pred_check
        %p476 = pneg %p475
      $region50: #{tpu_custom_call.1} parent=5 // pred_check_branch
        %478 = sbr.rel (%p476) target = $region52
      $region51: #{tpu_custom_call.1} parent=5 // pred_region
        %s479 = ssub.s32 %s15, 2
        // Predicated region
        $region53: #{tpu_custom_call.1} parent=51 // pred_check
          %p480 = pneg %p182
        $region54: #{tpu_custom_call.1} parent=51 // pred_check_branch
          %482 = sbr.rel (%p480) target = $region56
        $region55: #{tpu_custom_call.1} parent=51 // pred_region
          %s483 = sand.u32 %s167, 1
          %s484 = scalar_lea.sflag [#allocation4], %s483
          %s485 = sand.u32 %s167, 1
          %s486 = smul.addr %s485, 8
          %s487 = scalar_lea.vmem [#allocation5], %s486
          %488 = dma.done %s484, 128
        $region56: #{tpu_custom_call.1} parent=51 // pred_fallthru
          _
      $region52: #{tpu_custom_call.1} parent=5 // pred_fallthru
        _
    $region6: #{tpu_custom_call.1} parent=1 // loop_footer
      %s19 = sadd.s32 1, %s15
    $region7: #{tpu_custom_call.1} parent=1 // loop_footer_branch
      %14 = sbr.rel target = $region3
    $region8: #{tpu_custom_call.1} parent=1 // loop_exit
      _
    %489 = vsyncpa [#allocation3], 1
    %s490 = scalar_lea.sflag [#allocation3], 1
    %491 = vsyncpa %s490, 1
    %492 = vsyncpa [#allocation4], 1
    %s493 = scalar_lea.sflag [#allocation4], 1
    %494 = vsyncpa %s493, 1

</llo_original>
